<compile_context>
chip_gen: v7x
topology: tpu7x:2x2x1
jax: 0.10.0
libtpu: 0.0.40
codegen_flags: <defaults>
</compile_context>

<pallas_src>
import functools

import jax
import jax.numpy as jnp
from jax.experimental import pallas as pl
from jax.experimental.pallas import tpu as pltpu


def _round_up(x, m):
    return ((x + m - 1) // m) * m


def actor_kernel(s_ref, w1_ref, w2_ref, w3_ref, hb_ref, ob_ref, o_ref, *,
                 num_actions):
    """One batch tile of the full forward pass (all operands VMEM-resident).

        h1 = relu(s  @ W1 + b1)
        h2 = relu(h1 @ W2 + b2)
        o  = tanh(h2 @ W3 + b3) * action_scale + action_bias

    hb_ref packs [b1; b2] as (2, Hp) f32; ob_ref packs [b3; scale; bias] as
    (3, Ap) f32. Weights/state are bf16, MXU accumulates in f32. Hidden/action
    feature dims are zero-padded to 128 lanes for the compute, but only the
    real `num_actions` lanes are stored to HBM.
    """
    x = s_ref[...]                                                    # bf16
    h = jnp.dot(x, w1_ref[...], preferred_element_type=jnp.float32)  # MXU
    h = jnp.maximum(h + hb_ref[0:1, :], 0.0)                         # f32 ReLU
    h = jnp.dot(h.astype(jnp.bfloat16), w2_ref[...],
                preferred_element_type=jnp.float32)
    h = jnp.maximum(h + hb_ref[1:2, :], 0.0)
    a = jnp.dot(h.astype(jnp.bfloat16), w3_ref[...],
                preferred_element_type=jnp.float32)
    a = jnp.tanh(a + ob_ref[0:1, :])                                 # EUP tanh
    a = a * ob_ref[1:2, :] + ob_ref[2:3, :]                          # affine
    # Narrow store: only the real action lanes go to HBM.
    o_ref[...] = a[:, :num_actions]


@functools.partial(jax.jit,
                   static_argnames=("num_actions", "hidden_dim", "block_b"))
def actor_forward(state, packed_params, *, num_actions, hidden_dim,
                  block_b=4096):
    """state: [B, state_dim] -> actions [B, num_actions] float32."""
    w1, w2, w3, hbias, obias = packed_params
    B, S = state.shape
    Hp = w1.shape[1]
    Ap = w3.shape[1]

    # Halve state-input HBM traffic (no-op if the caller already holds bf16).
    state = state.astype(jnp.bfloat16)

    # Batch tile: multiple of 8 sublanes, capped at block_b, and chosen so the
    # grid has >=2 steps whenever B allows (v7x dual-TC sharding via "parallel").
    TB = max(8, min(block_b, _round_up(pl.cdiv(B, 2), 8)))
    grid = (pl.cdiv(B, TB),)

    # Logical (unpadded) cost estimate — keeps XLA's scheduling honest.
    flops = 2 * B * (S * hidden_dim + hidden_dim * hidden_dim
                     + hidden_dim * num_actions)
    bytes_accessed = (2 * B * S                      # bf16 state in
                      + 4 * B * num_actions          # f32 actions out
                      + 2 * (S * hidden_dim + hidden_dim * hidden_dim
                             + hidden_dim * num_actions)   # bf16 weights
                      + 4 * (2 * hidden_dim + 3 * num_actions))  # f32 biases

    kernel = functools.partial(actor_kernel, num_actions=num_actions)
    return pl.pallas_call(
        kernel,
        out_shape=jax.ShapeDtypeStruct((B, num_actions), jnp.float32),
        grid=grid,
        in_specs=[
            pl.BlockSpec((TB, S), lambda i: (i, 0)),     # state tile (pipelined)
            pl.BlockSpec((S, Hp), lambda i: (0, 0)),     # W1 (resident)
            pl.BlockSpec((Hp, Hp), lambda i: (0, 0)),    # W2 (resident)
            pl.BlockSpec((Hp, Ap), lambda i: (0, 0)),    # W3 (resident)
            pl.BlockSpec((2, Hp), lambda i: (0, 0)),     # [b1; b2]
            pl.BlockSpec((3, Ap), lambda i: (0, 0)),     # [b3; scale; bias]
        ],
        out_specs=pl.BlockSpec((TB, num_actions), lambda i: (i, 0)),
        compiler_params=pltpu.CompilerParams(
            dimension_semantics=("parallel",),           # 2-TC sharding on v7x
            vmem_limit_bytes=48 * 1024 * 1024,           # safe on all of v5e/v6e/v7x
        ),
        cost_estimate=pl.CostEstimate(
            flops=flops,
            transcendentals=B * num_actions,
            bytes_accessed=bytes_accessed,
        ),
    )(state, w1, w2, w3, hbias, obias)


def xavier_uniform(key, fan_in, fan_out):
    """torch.nn.init.xavier_uniform_(gain=1), generated in [in, out] layout."""
    bound = jnp.sqrt(6.0 / (fan_in + fan_out))
    return jax.random.uniform(key, (fan_in, fan_out), jnp.float32,
                              minval=-bound, maxval=bound)


def init_actor_params(key, state_dim, num_actions, hidden_dim,
                      action_high, action_low):
    """Returns dict with:
       'packed'      -> lane-padded kernel inputs (w1, w2, w3 bf16; hbias, obias f32)
       'raw'         -> unpadded f32 tensors for the pure-JAX reference
       'num_actions' -> logical action count
       'hidden_dim'  -> logical hidden size
    """
    Hp = _round_up(hidden_dim, 128)
    Ap = _round_up(num_actions, 128)

    k1, k2, k3 = jax.random.split(key, 3)
    # Xavier draws use the *logical* fan_in/fan_out to match the PyTorch init.
    w1 = xavier_uniform(k1, state_dim, hidden_dim)
    w2 = xavier_uniform(k2, hidden_dim, hidden_dim)
    w3 = xavier_uniform(k3, hidden_dim, num_actions)
    b1 = jnp.zeros((hidden_dim,), jnp.float32)            # constant_(bias, 0)
    b2 = jnp.zeros((hidden_dim,), jnp.float32)
    b3 = jnp.zeros((num_actions,), jnp.float32)
    scale = ((action_high - action_low) / 2.0).astype(jnp.float32)
    bias = ((action_high + action_low) / 2.0).astype(jnp.float32)

    # Zero-pad features to lane multiples, then cast weights to bf16 (native
    # MXU dtype). Padded columns stay exactly zero through relu / tanh*0+0.
    w1p = jnp.zeros((state_dim, Hp), jnp.float32).at[:, :hidden_dim].set(w1)
    w2p = jnp.zeros((Hp, Hp), jnp.float32).at[:hidden_dim, :hidden_dim].set(w2)
    w3p = jnp.zeros((Hp, Ap), jnp.float32).at[:hidden_dim, :num_actions].set(w3)
    w1p, w2p, w3p = (w.astype(jnp.bfloat16) for w in (w1p, w2p, w3p))
    hbias = jnp.zeros((2, Hp), jnp.float32)                # [b1; b2] (all zero)
    obias = jnp.zeros((3, Ap), jnp.float32)
    obias = obias.at[1, :num_actions].set(scale)           # row0 = b3 (zero)
    obias = obias.at[2, :num_actions].set(bias)

    return {
        "packed": (w1p, w2p, w3p, hbias, obias),
        "raw": (w1, b1, w2, b2, w3, b3, scale, bias),
        "num_actions": num_actions,
        "hidden_dim": hidden_dim,
    }


def actor_forward_ref(state, params):
    """Pure-JAX f32 reference (unpadded), matching the PyTorch forward."""
    w1, b1, w2, b2, w3, b3, scale, bias = params["raw"]
    x = jax.nn.relu(state @ w1 + b1)
    x = jax.nn.relu(x @ w2 + b2)
    return jnp.tanh(x @ w3 + b3) * scale + bias


def actor_forward_ref_bf16(state, params):
    """Reference with the same bf16-input / f32-accumulate rounding as the kernel."""
    w1, b1, w2, b2, w3, b3, scale, bias = params["raw"]
    bf = lambda t: t.astype(jnp.bfloat16)
    h = jax.nn.relu(jnp.dot(bf(state), bf(w1),
                            preferred_element_type=jnp.float32) + b1)
    h = jax.nn.relu(jnp.dot(bf(h), bf(w2),
                            preferred_element_type=jnp.float32) + b2)
    a = jnp.tanh(jnp.dot(bf(h), bf(w3),
                         preferred_element_type=jnp.float32) + b3)
    return a * scale + bias


def actor_apply(state, params, *, block_b=4096):
    """User-facing forward: output is already (B, num_actions); no slicing."""
    return actor_forward(state, params["packed"],
                         num_actions=params["num_actions"],
                         hidden_dim=params["hidden_dim"],
                         block_b=block_b)


if __name__ == "__main__":
    # Small shapes consistent with the module.
    batch = 8
    state_dim = 16
    hidden_dim = 32
    num_actions = 4

    key = jax.random.PRNGKey(0)
    k_param, k_state, k_state2 = jax.random.split(key, 3)

    # Synthetic action_space.high / action_space.low (deterministic).
    action_high = jnp.array([1.0, 2.0, 0.5, 1.5], jnp.float32)
    action_low = jnp.array([-1.0, -2.0, -1.5, -0.5], jnp.float32)

    params = init_actor_params(k_param, state_dim, num_actions, hidden_dim,
                               action_high, action_low)

    # --- small batch (single grid step) ---
    state = jax.random.normal(k_state, (batch, state_dim), jnp.float32)
    out = jax.block_until_ready(actor_apply(state, params))
    assert out.shape == (batch, num_actions)
    # Tight check vs a reference with identical bf16 rounding.
    assert jnp.allclose(out, actor_forward_ref_bf16(state, params),
                        atol=1e-3, rtol=1e-3), "mismatch vs bf16 reference"
    # Looser check vs the exact f32 PyTorch-semantics reference.
    assert jnp.allclose(out, actor_forward_ref(state, params),
                        atol=5e-2), "mismatch vs f32 reference"

    # --- larger ragged batch (multi-step grid + trailing partial tile,
    #     no host-side padding) ---
    state2 = jax.random.normal(k_state2, (300, state_dim), jnp.float32)
    out2 = jax.block_until_ready(actor_apply(state2, params, block_b=128))
    assert out2.shape == (300, num_actions)
    assert jnp.allclose(out2, actor_forward_ref_bf16(state2, params),
                        atol=1e-3, rtol=1e-3), "mismatch (tiled) vs bf16 ref"
    assert jnp.allclose(out2, actor_forward_ref(state2, params),
                        atol=5e-2), "mismatch (tiled) vs f32 ref"

    print("KERNEL_OK")
</pallas_src>

<mosaic_0001>
module attributes {stable_mosaic.version = 11 : i64} {
  func.func @actor_kernel(%arg0: i32, %arg1: memref<8x16xbf16, #tpu.memory_space<vmem>>, %arg2: memref<16x128xbf16, #tpu.memory_space<vmem>>, %arg3: memref<128x128xbf16, #tpu.memory_space<vmem>>, %arg4: memref<128x128xbf16, #tpu.memory_space<vmem>>, %arg5: memref<2x128xf32, #tpu.memory_space<vmem>>, %arg6: memref<3x128xf32, #tpu.memory_space<vmem>>, %arg7: memref<8x4xf32, #tpu.memory_space<vmem>>) attributes {dimension_semantics = [#tpu.dimension_semantics<parallel>], iteration_bounds = array<i64: 1>, scalar_prefetch = 0 : i64, scratch_operands = 0 : i64, tpu.core_type = #tpu.core_type<tc>, window_params = [{transform_indices = @transform_0, window_bounds = array<i64: 8, 16>}, {pipeline_mode = #tpu.pipeline_mode<synchronous>, transform_indices = @transform_1, window_bounds = array<i64: 16, 128>}, {pipeline_mode = #tpu.pipeline_mode<synchronous>, transform_indices = @transform_2, window_bounds = array<i64: 128, 128>}, {pipeline_mode = #tpu.pipeline_mode<synchronous>, transform_indices = @transform_3, window_bounds = array<i64: 128, 128>}, {pipeline_mode = #tpu.pipeline_mode<synchronous>, transform_indices = @transform_4, window_bounds = array<i64: 2, 128>}, {pipeline_mode = #tpu.pipeline_mode<synchronous>, transform_indices = @transform_5, window_bounds = array<i64: 3, 128>}, {transform_indices = @transform_6, window_bounds = array<i64: 8, 4>}]} {
    %c0 = arith.constant 0 : index
    %c0_0 = arith.constant 0 : index
    %0 = vector.load %arg1[%c0, %c0_0] : memref<8x16xbf16, #tpu.memory_space<vmem>>, vector<8x16xbf16>
    %c0_1 = arith.constant 0 : index
    %c0_2 = arith.constant 0 : index
    %1 = vector.load %arg2[%c0_1, %c0_2] : memref<16x128xbf16, #tpu.memory_space<vmem>>, vector<16x128xbf16>
    %cst = arith.constant dense<0.000000e+00> : vector<8x128xf32>
    %2 = tpu.matmul %0, %1, %cst {dimension_numbers = #tpu.dot_dimension_numbers<[1], [0], [0], [1], [0, 0, 1, 1], [], []>} : vector<8x16xbf16>, vector<16x128xbf16>, vector<8x128xf32> -> vector<8x128xf32>
    %c0_3 = arith.constant 0 : index
    %c0_4 = arith.constant 0 : index
    %3 = vector.load %arg5[%c0_3, %c0_4] : memref<2x128xf32, #tpu.memory_space<vmem>>, vector<1x128xf32>
    %4 = vector.broadcast %3 : vector<1x128xf32> to vector<8x128xf32>
    %5 = arith.addf %2, %4 : vector<8x128xf32>
    %cst_5 = arith.constant 0.000000e+00 : f32
    %6 = vector.broadcast %cst_5 : f32 to vector<8x128xf32>
    %7 = arith.maximumf %5, %6 : vector<8x128xf32>
    %8 = arith.truncf %7 : vector<8x128xf32> to vector<8x128xbf16>
    %c0_6 = arith.constant 0 : index
    %c0_7 = arith.constant 0 : index
    %9 = vector.load %arg3[%c0_6, %c0_7] : memref<128x128xbf16, #tpu.memory_space<vmem>>, vector<128x128xbf16>
    %cst_8 = arith.constant dense<0.000000e+00> : vector<8x128xf32>
    %10 = tpu.matmul %8, %9, %cst_8 {dimension_numbers = #tpu.dot_dimension_numbers<[1], [0], [0], [1], [0, 0, 1, 1], [], []>} : vector<8x128xbf16>, vector<128x128xbf16>, vector<8x128xf32> -> vector<8x128xf32>
    %c1 = arith.constant 1 : index
    %c0_9 = arith.constant 0 : index
    %11 = vector.load %arg5[%c1, %c0_9] : memref<2x128xf32, #tpu.memory_space<vmem>>, vector<1x128xf32>
    %12 = vector.broadcast %11 : vector<1x128xf32> to vector<8x128xf32>
    %13 = arith.addf %10, %12 : vector<8x128xf32>
    %cst_10 = arith.constant 0.000000e+00 : f32
    %14 = vector.broadcast %cst_10 : f32 to vector<8x128xf32>
    %15 = arith.maximumf %13, %14 : vector<8x128xf32>
    %16 = arith.truncf %15 : vector<8x128xf32> to vector<8x128xbf16>
    %c0_11 = arith.constant 0 : index
    %c0_12 = arith.constant 0 : index
    %17 = vector.load %arg4[%c0_11, %c0_12] : memref<128x128xbf16, #tpu.memory_space<vmem>>, vector<128x128xbf16>
    %cst_13 = arith.constant dense<0.000000e+00> : vector<8x128xf32>
    %18 = tpu.matmul %16, %17, %cst_13 {dimension_numbers = #tpu.dot_dimension_numbers<[1], [0], [0], [1], [0, 0, 1, 1], [], []>} : vector<8x128xbf16>, vector<128x128xbf16>, vector<8x128xf32> -> vector<8x128xf32>
    %c0_14 = arith.constant 0 : index
    %c0_15 = arith.constant 0 : index
    %19 = vector.load %arg6[%c0_14, %c0_15] : memref<3x128xf32, #tpu.memory_space<vmem>>, vector<1x128xf32>
    %20 = vector.broadcast %19 : vector<1x128xf32> to vector<8x128xf32>
    %21 = arith.addf %18, %20 : vector<8x128xf32>
    %22 = math.tanh %21 : vector<8x128xf32>
    %c1_16 = arith.constant 1 : index
    %c0_17 = arith.constant 0 : index
    %23 = vector.load %arg6[%c1_16, %c0_17] : memref<3x128xf32, #tpu.memory_space<vmem>>, vector<1x128xf32>
    %24 = vector.broadcast %23 : vector<1x128xf32> to vector<8x128xf32>
    %25 = arith.mulf %22, %24 : vector<8x128xf32>
    %c2 = arith.constant 2 : index
    %c0_18 = arith.constant 0 : index
    %26 = vector.load %arg6[%c2, %c0_18] : memref<3x128xf32, #tpu.memory_space<vmem>>, vector<1x128xf32>
    %27 = vector.broadcast %26 : vector<1x128xf32> to vector<8x128xf32>
    %28 = arith.addf %25, %27 : vector<8x128xf32>
    %29 = vector.extract_strided_slice %28 {offsets = [0, 0], sizes = [8, 4], strides = [1, 1]} : vector<8x128xf32> to vector<8x4xf32>
    %c0_19 = arith.constant 0 : index
    %c0_20 = arith.constant 0 : index
    %30 = vector.load %arg7[%c0_19, %c0_20] : memref<8x4xf32, #tpu.memory_space<vmem>>, vector<8x4xf32>
    tpu.vector_store %arg7[%c0_19, %c0_20], %29 {strides = array<i32>} : memref<8x4xf32, #tpu.memory_space<vmem>>, vector<8x4xf32>,
    return
  }
  func.func @transform_0(%arg0: i32) -> (i32, i32) {
    %c0_i32 = arith.constant 0 : i32
    %c0_i32_0 = arith.constant 0 : i32
    return %arg0, %c0_i32 : i32, i32
  }
  func.func @transform_1(%arg0: i32) -> (i32, i32) {
    %c0_i32 = arith.constant 0 : i32
    %c0_i32_0 = arith.constant 0 : i32
    %c0_i32_1 = arith.constant 0 : i32
    return %c0_i32, %c0_i32_0 : i32, i32
  }
  func.func @transform_2(%arg0: i32) -> (i32, i32) {
    %c0_i32 = arith.constant 0 : i32
    %c0_i32_0 = arith.constant 0 : i32
    %c0_i32_1 = arith.constant 0 : i32
    return %c0_i32, %c0_i32_0 : i32, i32
  }
  func.func @transform_3(%arg0: i32) -> (i32, i32) {
    %c0_i32 = arith.constant 0 : i32
    %c0_i32_0 = arith.constant 0 : i32
    %c0_i32_1 = arith.constant 0 : i32
    return %c0_i32, %c0_i32_0 : i32, i32
  }
  func.func @transform_4(%arg0: i32) -> (i32, i32) {
    %c0_i32 = arith.constant 0 : i32
    %c0_i32_0 = arith.constant 0 : i32
    %c0_i32_1 = arith.constant 0 : i32
    return %c0_i32, %c0_i32_0 : i32, i32
  }
  func.func @transform_5(%arg0: i32) -> (i32, i32) {
    %c0_i32 = arith.constant 0 : i32
    %c0_i32_0 = arith.constant 0 : i32
    %c0_i32_1 = arith.constant 0 : i32
    return %c0_i32, %c0_i32_0 : i32, i32
  }
  func.func @transform_6(%arg0: i32) -> (i32, i32) {
    %c0_i32 = arith.constant 0 : i32
    %c0_i32_0 = arith.constant 0 : i32
    return %arg0, %c0_i32 : i32, i32
  }
}

</mosaic_0001>

<llo_original>
// kernel: actor_forward.1
$region0: #{actor_forward.1}
  #allocation0 [shape = 'u32[]', space=smem, size = 0x4, offset = 0x4, fixed_abs, tag = 'smem constant byte address 0x4 - core index']
  #allocation1 [shape = 'u32[144,128]{1,0:T(1,128)}', space=vmem, size = 0x12000, scoped, tag = 'internal scratch']
  %s0 = inlined_call_operand.vmem [shape: bf16[8,16], index: 0, kind: input, shape index: {}]
  %s1 = inlined_call_operand.vmem [shape: bf16[16,128], index: 1, kind: input, shape index: {}]
  %s2 = inlined_call_operand.hbm [shape: bf16[128,128], index: 2, kind: input, shape index: {}]
  %s3 = inlined_call_operand.hbm [shape: bf16[128,128], index: 3, kind: input, shape index: {}]
  %s4 = inlined_call_operand.vmem [shape: f32[2,128], index: 4, kind: input, shape index: {}]
  %s5 = inlined_call_operand.vmem [shape: f32[3,128], index: 5, kind: input, shape index: {}]
  %s6 = inlined_call_operand.vmem [shape: f32[8,4], index: 6, kind: output, shape index: {}]
  %s7 = sld [smem:[#allocation0]]
  $region42: #{actor_forward.1} parent=0
    _
  %s9 = ssub.s32 1, %s7
  %s10 = scalar_select 0, %s9, %s7
  $region1: #{actor_forward.1} parent=0
    #allocation2 [shape = 'u8[32768]{0}', space=vmem, size = 0x8000, scoped, tag = 'input window, operand 2, single buffered']
    #allocation3 [shape = 's32[1]{0}', space=sflag, size = 0x4, scoped, tag = 'scoped memory for actor_forward.1']
    #allocation4 [shape = 'u8[32768]{0}', space=vmem, size = 0x8000, scoped, tag = 'input window, operand 3, single buffered']
    #allocation5 [shape = 's32[1]{0}', space=sflag, size = 0x4, scoped, tag = 'scoped memory for actor_forward.1']
    %11 = vsyncpa [#allocation3], 0
    %12 = vsyncpa [#allocation5], 0
    // Predicated region
    $region2: #{actor_forward.1} parent=1 // pred_check
      _
    $region3: #{actor_forward.1} parent=1 // pred_check_branch
      %14 = sbr.rel (0) target = $region5
    $region4: #{actor_forward.1} parent=1 // pred_region
      _
    $region5: #{actor_forward.1} parent=1 // pred_fallthru
      _
    // Predicated region
    $region6: #{actor_forward.1} parent=1 // pred_check
      _
    $region7: #{actor_forward.1} parent=1 // pred_check_branch
      %16 = sbr.rel (0) target = $region9
    $region8: #{actor_forward.1} parent=1 // pred_region
      _
    $region9: #{actor_forward.1} parent=1 // pred_fallthru
      _
    // Predicated region
    $region10: #{actor_forward.1} parent=1 // pred_check
      _
    $region11: #{actor_forward.1} parent=1 // pred_check_branch
      %18 = sbr.rel (0) target = $region13
    $region12: #{actor_forward.1} parent=1 // pred_region
      %s20 = ssub.s32 1024, 1024
      %21 = vsyncadd [#allocation3], %s20
      %s22 = sshll.u32 [#allocation2], 4
      %s23 = int_to_ptr.vmem [resolvable:$true] %s22
      %28 = dma.hbm_to_vmem [thread:$0]  %s2, 1024, %s23, [#allocation3], 64, 64, 4
    $region13: #{actor_forward.1} parent=1 // pred_fallthru
      _
    // Predicated region
    $region14: #{actor_forward.1} parent=1 // pred_check
      _
    $region15: #{actor_forward.1} parent=1 // pred_check_branch
      %30 = sbr.rel (0) target = $region17
    $region16: #{actor_forward.1} parent=1 // pred_region
      %s32 = ssub.s32 1024, 1024
      %33 = vsyncadd [#allocation5], %s32
      %s34 = sshll.u32 [#allocation4], 4
      %s35 = int_to_ptr.vmem [resolvable:$true] %s34
      %40 = dma.hbm_to_vmem [thread:$0]  %s3, 1024, %s35, [#allocation5], 64, 64, 4
    $region17: #{actor_forward.1} parent=1 // pred_fallthru
      _
    // Predicated region
    $region18: #{actor_forward.1} parent=1 // pred_check
      _
    $region19: #{actor_forward.1} parent=1 // pred_check_branch
      %42 = sbr.rel (0) target = $region21
    $region20: #{actor_forward.1} parent=1 // pred_region
      _
    $region21: #{actor_forward.1} parent=1 // pred_fallthru
      _
    // Predicated region
    $region22: #{actor_forward.1} parent=1 // pred_check
      _
    $region23: #{actor_forward.1} parent=1 // pred_check_branch
      %44 = sbr.rel (0) target = $region25
    $region24: #{actor_forward.1} parent=1 // pred_region
      _
    $region25: #{actor_forward.1} parent=1 // pred_fallthru
      _
    // Predicated region
    $region26: #{actor_forward.1} parent=1 // pred_check
      _
    $region27: #{actor_forward.1} parent=1 // pred_check_branch
      %46 = sbr.rel (0) target = $region29
    $region28: #{actor_forward.1} parent=1 // pred_region
      %47 = dma.done [#allocation3], 1024
    $region29: #{actor_forward.1} parent=1 // pred_fallthru
      _
    // Predicated region
    $region30: #{actor_forward.1} parent=1 // pred_check
      _
    $region31: #{actor_forward.1} parent=1 // pred_check_branch
      %49 = sbr.rel (0) target = $region33
    $region32: #{actor_forward.1} parent=1 // pred_region
      %50 = dma.done [#allocation5], 1024
    $region33: #{actor_forward.1} parent=1 // pred_fallthru
      _
    %v52 = vld [vmem:[%s0] sm:$0xf]
    %v53 = vld [vmem:[%s1] sm:$0xf]
    %v54 = vld [vmem:[%s1 + $0x4] sm:$0xf]
    %v55 = vld [vmem:[%s4] sm:$0x1]
    %v56 = vlaneseq
    %v57 = vshrl.u32 %v56, 7
    %v58 = vsub.s32 0, %v57
    %v59 = vrot.slane %v55, %v58
    %v62 = vunpack.c.l.b16 %v53
    %v63 = vunpack.c.l.b16 %v54
    %v64 = vpack.c.b16 %v63, %v62
    %vm66 = vcmask 130048
    %v68 = vsel %vm66, %v52, 0
    %70 = vmatprep.subr.bf16.mxu0 0
    %71 = vmatpush1.bf16.msra.mxu0 %v64
    %72 = vmatprep.subr.bf16.mxu0 0
    %73 = vmatpush1.bf16.msra.mxu0 0
    %74 = vmatprep.subr.bf16.mxu0 0
    %75 = vmatpush1.bf16.msra.mxu0 0
    %76 = vmatprep.subr.bf16.mxu0 0
    %77 = vmatpush1.bf16.msra.mxu0 0
    %78 = vmatprep.subr.bf16.mxu0 0
    %79 = vmatpush1.bf16.msra.mxu0 0
    %80 = vmatprep.subr.bf16.mxu0 0
    %81 = vmatpush1.bf16.msra.mxu0 0
    %82 = vmatprep.subr.bf16.mxu0 0
    %83 = vmatpush1.bf16.msra.mxu0 0
    %84 = vmatprep.subr.bf16.mxu0 0
    %85 = vmatpush1.bf16.msra.mxu0 0
    %86 = vmatprep.subr.bf16.mxu0 0
    %87 = vmatpush1.bf16.msra.mxu0 0
    %88 = vmatprep.subr.bf16.mxu0 0
    %89 = vmatpush1.bf16.msra.mxu0 0
    %90 = vmatprep.subr.bf16.mxu0 0
    %91 = vmatpush1.bf16.msra.mxu0 0
    %92 = vmatprep.subr.bf16.mxu0 0
    %93 = vmatpush1.bf16.msra.mxu0 0
    %94 = vmatprep.subr.bf16.mxu0 0
    %95 = vmatpush1.bf16.msra.mxu0 0
    %96 = vmatprep.subr.bf16.mxu0 0
    %97 = vmatpush1.bf16.msra.mxu0 0
    %98 = vmatprep.subr.bf16.mxu0 0
    %99 = vmatpush1.bf16.msra.mxu0 0
    %100 = vmatprep.subr.bf16.mxu0 0
    %101 = vmatpush1.bf16.msra.mxu0 0
    %102 = vmatprep.mubr.bf16.mxu0 0
    %103 = vmatmul.mubr.bf16.gmra.mrb[0].mxu0 %v68
    %v104 = vpop.f32.mrb[0].mxu0
    %v105 = vadd.f32 %v59, %v104
    %v106 = vpop.f32.mrb[0].mxu0
    %v107 = vpop.f32.mrb[0].mxu0
    %v108 = vpop.f32.mrb[0].mxu0
    %109 = vdwg.mxu0
    %v110 = vmax.f32 %v105, 0.0
    %v111 = vpack.c.bf16 %v110, %v110
    %v112 = vld [vmem:[#allocation2] sm:$0xf]
    %v113 = vld [vmem:[#allocation2 + $0x4] sm:$0xf]
    %v114 = vld [vmem:[#allocation2 + $0x8] sm:$0xf]
    %v115 = vld [vmem:[#allocation2 + $0xc] sm:$0xf]
    %v116 = vld [vmem:[#allocation2 + $0x10] sm:$0xf]
    %v117 = vld [vmem:[#allocation2 + $0x14] sm:$0xf]
    %v118 = vld [vmem:[#allocation2 + $0x18] sm:$0xf]
    %v119 = vld [vmem:[#allocation2 + $0x1c] sm:$0xf]
    %v120 = vld [vmem:[#allocation2 + $0x20] sm:$0xf]
    %v121 = vld [vmem:[#allocation2 + $0x24] sm:$0xf]
    %v122 = vld [vmem:[#allocation2 + $0x28] sm:$0xf]
    %v123 = vld [vmem:[#allocation2 + $0x2c] sm:$0xf]
    %v124 = vld [vmem:[#allocation2 + $0x30] sm:$0xf]
    %v125 = vld [vmem:[#allocation2 + $0x34] sm:$0xf]
    %v126 = vld [vmem:[#allocation2 + $0x38] sm:$0xf]
    %v127 = vld [vmem:[#allocation2 + $0x3c] sm:$0xf]
    %v128 = vld [vmem:[%s4 + $0x1] sm:$0x1]
    %v129 = vlaneseq
    %v130 = vshrl.u32 %v129, 7
    %v131 = vsub.s32 0, %v130
    %v132 = vrot.slane %v128, %v131
    %v149 = vunpack.c.l.b16 %v112
    %v150 = vunpack.c.l.b16 %v113
    %v151 = vunpack.c.l.b16 %v114
    %v152 = vunpack.c.l.b16 %v115
    %v153 = vunpack.c.l.b16 %v116
    %v154 = vunpack.c.l.b16 %v117
    %v155 = vunpack.c.l.b16 %v118
    %v156 = vunpack.c.l.b16 %v119
    %v157 = vunpack.c.l.b16 %v120
    %v158 = vunpack.c.l.b16 %v121
    %v159 = vunpack.c.l.b16 %v122
    %v160 = vunpack.c.l.b16 %v123
    %v161 = vunpack.c.l.b16 %v124
    %v162 = vunpack.c.l.b16 %v125
    %v163 = vunpack.c.l.b16 %v126
    %v164 = vunpack.c.l.b16 %v127
    %v165 = vpack.c.b16 %v150, %v149
    %v166 = vpack.c.b16 %v152, %v151
    %v167 = vpack.c.b16 %v154, %v153
    %v168 = vpack.c.b16 %v156, %v155
    %v169 = vpack.c.b16 %v158, %v157
    %v170 = vpack.c.b16 %v160, %v159
    %v171 = vpack.c.b16 %v162, %v161
    %v172 = vpack.c.b16 %v164, %v163
    %181 = vmatprep.subr.bf16.mxu0 0
    %182 = vmatpush1.bf16.msra.mxu0 %v165
    %183 = vmatprep.subr.bf16.mxu0 0
    %184 = vmatpush1.bf16.msra.mxu0 %v166
    %185 = vmatprep.subr.bf16.mxu0 0
    %186 = vmatpush1.bf16.msra.mxu0 %v167
    %187 = vmatprep.subr.bf16.mxu0 0
    %188 = vmatpush1.bf16.msra.mxu0 %v168
    %189 = vmatprep.subr.bf16.mxu0 0
    %190 = vmatpush1.bf16.msra.mxu0 %v169
    %191 = vmatprep.subr.bf16.mxu0 0
    %192 = vmatpush1.bf16.msra.mxu0 %v170
    %193 = vmatprep.subr.bf16.mxu0 0
    %194 = vmatpush1.bf16.msra.mxu0 %v171
    %195 = vmatprep.subr.bf16.mxu0 0
    %196 = vmatpush1.bf16.msra.mxu0 %v172
    %197 = vmatprep.subr.bf16.mxu0 0
    %198 = vmatpush1.bf16.msra.mxu0 0
    %199 = vmatprep.subr.bf16.mxu0 0
    %200 = vmatpush1.bf16.msra.mxu0 0
    %201 = vmatprep.subr.bf16.mxu0 0
    %202 = vmatpush1.bf16.msra.mxu0 0
    %203 = vmatprep.subr.bf16.mxu0 0
    %204 = vmatpush1.bf16.msra.mxu0 0
    %205 = vmatprep.subr.bf16.mxu0 0
    %206 = vmatpush1.bf16.msra.mxu0 0
    %207 = vmatprep.subr.bf16.mxu0 0
    %208 = vmatpush1.bf16.msra.mxu0 0
    %209 = vmatprep.subr.bf16.mxu0 0
    %210 = vmatpush1.bf16.msra.mxu0 0
    %211 = vmatprep.subr.bf16.mxu0 0
    %212 = vmatpush1.bf16.msra.mxu0 0
    %213 = vmatprep.mubr.bf16.mxu0 0
    %214 = vmatmul.mubr.bf16.gmra.mrb[0].mxu0 %v111
    %v215 = vpop.f32.mrb[0].mxu0
    %v216 = vadd.f32 %v132, %v215
    %v217 = vpop.f32.mrb[0].mxu0
    %v218 = vpop.f32.mrb[0].mxu0
    %v219 = vpop.f32.mrb[0].mxu0
    %220 = vdwg.mxu0
    %v221 = vmax.f32 %v216, 0.0
    %v222 = vpack.c.bf16 %v221, %v221
    %v223 = vld [vmem:[#allocation4] sm:$0xf]
    %v224 = vld [vmem:[#allocation4 + $0x4] sm:$0xf]
    %v225 = vld [vmem:[#allocation4 + $0x8] sm:$0xf]
    %v226 = vld [vmem:[#allocation4 + $0xc] sm:$0xf]
    %v227 = vld [vmem:[#allocation4 + $0x10] sm:$0xf]
    %v228 = vld [vmem:[#allocation4 + $0x14] sm:$0xf]
    %v229 = vld [vmem:[#allocation4 + $0x18] sm:$0xf]
    %v230 = vld [vmem:[#allocation4 + $0x1c] sm:$0xf]
    %v231 = vld [vmem:[#allocation4 + $0x20] sm:$0xf]
    %v232 = vld [vmem:[#allocation4 + $0x24] sm:$0xf]
    %v233 = vld [vmem:[#allocation4 + $0x28] sm:$0xf]
    %v234 = vld [vmem:[#allocation4 + $0x2c] sm:$0xf]
    %v235 = vld [vmem:[#allocation4 + $0x30] sm:$0xf]
    %v236 = vld [vmem:[#allocation4 + $0x34] sm:$0xf]
    %v237 = vld [vmem:[#allocation4 + $0x38] sm:$0xf]
    %v238 = vld [vmem:[#allocation4 + $0x3c] sm:$0xf]
    %v239 = vld [vmem:[%s5] sm:$0x1]
    %v240 = vlaneseq
    %v241 = vshrl.u32 %v240, 7
    %v242 = vsub.s32 0, %v241
    %v243 = vrot.slane %v239, %v242
    %v260 = vunpack.c.l.b16 %v223
    %v261 = vunpack.c.l.b16 %v224
    %v262 = vunpack.c.l.b16 %v225
    %v263 = vunpack.c.l.b16 %v226
    %v264 = vunpack.c.l.b16 %v227
    %v265 = vunpack.c.l.b16 %v228
    %v266 = vunpack.c.l.b16 %v229
    %v267 = vunpack.c.l.b16 %v230
    %v268 = vunpack.c.l.b16 %v231
    %v269 = vunpack.c.l.b16 %v232
    %v270 = vunpack.c.l.b16 %v233
    %v271 = vunpack.c.l.b16 %v234
    %v272 = vunpack.c.l.b16 %v235
    %v273 = vunpack.c.l.b16 %v236
    %v274 = vunpack.c.l.b16 %v237
    %v275 = vunpack.c.l.b16 %v238
    %v276 = vpack.c.b16 %v261, %v260
    %v277 = vpack.c.b16 %v263, %v262
    %v278 = vpack.c.b16 %v265, %v264
    %v279 = vpack.c.b16 %v267, %v266
    %v280 = vpack.c.b16 %v269, %v268
    %v281 = vpack.c.b16 %v271, %v270
    %v282 = vpack.c.b16 %v273, %v272
    %v283 = vpack.c.b16 %v275, %v274
    %292 = vmatprep.subr.bf16.mxu0 0
    %293 = vmatpush1.bf16.msra.mxu0 %v276
    %294 = vmatprep.subr.bf16.mxu0 0
    %295 = vmatpush1.bf16.msra.mxu0 %v277
    %296 = vmatprep.subr.bf16.mxu0 0
    %297 = vmatpush1.bf16.msra.mxu0 %v278
    %298 = vmatprep.subr.bf16.mxu0 0
    %299 = vmatpush1.bf16.msra.mxu0 %v279
    %300 = vmatprep.subr.bf16.mxu0 0
    %301 = vmatpush1.bf16.msra.mxu0 %v280
    %302 = vmatprep.subr.bf16.mxu0 0
    %303 = vmatpush1.bf16.msra.mxu0 %v281
    %304 = vmatprep.subr.bf16.mxu0 0
    %305 = vmatpush1.bf16.msra.mxu0 %v282
    %306 = vmatprep.subr.bf16.mxu0 0
    %307 = vmatpush1.bf16.msra.mxu0 %v283
    %308 = vmatprep.subr.bf16.mxu0 0
    %309 = vmatpush1.bf16.msra.mxu0 0
    %310 = vmatprep.subr.bf16.mxu0 0
    %311 = vmatpush1.bf16.msra.mxu0 0
    %312 = vmatprep.subr.bf16.mxu0 0
    %313 = vmatpush1.bf16.msra.mxu0 0
    %314 = vmatprep.subr.bf16.mxu0 0
    %315 = vmatpush1.bf16.msra.mxu0 0
    %316 = vmatprep.subr.bf16.mxu0 0
    %317 = vmatpush1.bf16.msra.mxu0 0
    %318 = vmatprep.subr.bf16.mxu0 0
    %319 = vmatpush1.bf16.msra.mxu0 0
    %320 = vmatprep.subr.bf16.mxu0 0
    %321 = vmatpush1.bf16.msra.mxu0 0
    %322 = vmatprep.subr.bf16.mxu0 0
    %323 = vmatpush1.bf16.msra.mxu0 0
    %324 = vmatprep.mubr.bf16.mxu0 0
    %325 = vmatmul.mubr.bf16.gmra.mrb[0].mxu0 %v222
    %v326 = vpop.f32.mrb[0].mxu0
    %v327 = vadd.f32 %v243, %v326
    %v328 = vpop.f32.mrb[0].mxu0
    %v329 = vpop.f32.mrb[0].mxu0
    %v330 = vpop.f32.mrb[0].mxu0
    %331 = vdwg.mxu0
    %v332 = vtanh.pop %v327
    %v333 = vld [vmem:[%s5 + $0x1] sm:$0x1]
    %v334 = vlaneseq
    %v335 = vshrl.u32 %v334, 7
    %v336 = vsub.s32 0, %v335
    %v337 = vrot.slane %v333, %v336
    %v338 = vmul.f32 %v332, %v337
    %v339 = vld [vmem:[%s5 + $0x2] sm:$0x1]
    %v340 = vlaneseq
    %v341 = vshrl.u32 %v340, 7
    %v342 = vsub.s32 0, %v341
    %v343 = vrot.slane %v339, %v342
    %v344 = vadd.f32 %v338, %v343
    %vm345 = vcmask 31744
    %346 = vst.msk [vmem:[%s6] sm:$0xff] %vm345, %v344
    // Predicated region
    $region34: #{actor_forward.1} parent=1 // pred_check
      _
    $region35: #{actor_forward.1} parent=1 // pred_check_branch
      %348 = sbr.rel (0) target = $region37
    $region36: #{actor_forward.1} parent=1 // pred_region
      _
    $region37: #{actor_forward.1} parent=1 // pred_fallthru
      _
    // Predicated region
    $region38: #{actor_forward.1} parent=1 // pred_check
      _
    $region39: #{actor_forward.1} parent=1 // pred_check_branch
      %350 = sbr.rel (0) target = $region41
    $region40: #{actor_forward.1} parent=1 // pred_region
      _
    $region41: #{actor_forward.1} parent=1 // pred_fallthru
      _
    %351 = vsyncpa [#allocation3], 1
    %352 = vsyncpa [#allocation5], 1

</llo_original>
